<compile_context>
chip_gen: v7x
topology: tpu7x:2x2x1
jax: 0.10.0
libtpu: 0.0.40
codegen_flags: <defaults>
</compile_context>

<pallas_src>
import jax
import jax.numpy as jnp
from jax import lax
from jax.experimental import pallas as pl
from jax.experimental.pallas import tpu as pltpu


# ---------------------------------------------------------------------------
# Kernel
# ---------------------------------------------------------------------------
def _proj_head_kernel(x_ref, w1_ref, b1_ref, w2_ref, b2_ref, o_ref):
    # x_ref: (C, TM) channels-first voxel tile (lane axis = voxels, dense).
    x = x_ref[...]

    # Conv3d(C, C, 1) with BN folded in, then ReLU:  h = relu(W1f @ x + b1f)
    h = jnp.dot(w1_ref[...], x, preferred_element_type=jnp.float32) + b1_ref[...]
    h = jnp.maximum(h, 0.0)

    # Conv3d(C, P, 1):  y = W2 @ h + b2
    y = jnp.dot(w2_ref[...], h, preferred_element_type=jnp.float32) + b2_ref[...]

    # F.normalize over the channel axis (rows): y / max(||y||_2, 1e-12)
    sumsq = jnp.sum(y * y, axis=0, keepdims=True)
    inv = lax.rsqrt(jnp.maximum(sumsq, 1e-24))   # clamp == clamping norm at 1e-12
    o_ref[...] = (y * inv).astype(o_ref.dtype)


# ---------------------------------------------------------------------------
# Per-generation tuning
# ---------------------------------------------------------------------------
_GEN_CONFIG = {
    # tile_cap (lanes), scoped-VMEM limit, target total grid steps
    "v5e": dict(tile_cap=4096,  vmem_limit=32 * (1 << 20), target_steps=4),
    "v6e": dict(tile_cap=16384, vmem_limit=48 * (1 << 20), target_steps=4),
    "v7x": dict(tile_cap=8192,  vmem_limit=40 * (1 << 20), target_steps=8),
}
_DEFAULT_CONFIG = dict(tile_cap=8192, vmem_limit=40 * (1 << 20), target_steps=8)


def _tpu_generation():
    try:
        kind = jax.devices()[0].device_kind.lower()
    except Exception:
        return None
    if "v5 lite" in kind or "v5e" in kind or "v5litepod" in kind:
        return "v5e"
    if "v6" in kind:
        return "v6e"
    if "v7" in kind:
        return "v7x"
    return None


def _pick_tile_m(M, N, C, P, tile_cap, vmem_limit, target_steps):
    """Lane-dense (mult-of-128) voxel tile with enough grid steps for pipelining."""
    if M <= 128:
        return M                                  # full lane dim, nothing to tile

    # VMEM-budget-aware cap: ~tile*4*(3C + 4P) bytes of double-buffered I/O +
    # resident intermediates; keep it under ~60% of the scoped limit.
    bytes_per_lane = 4 * (3 * C + 4 * P)
    budget_tile = max(128, int(0.6 * vmem_limit) // bytes_per_lane // 128 * 128)
    tile = min(tile_cap, budget_tile, M)
    tile = max(128, (tile // 128) * 128)          # lane-dense multiple of 128

    def total_steps(t):
        return N * (-(-M // t))

    # Shrink (never below 128 lanes) until there are enough grid steps for
    # prefetch/writeback overlap and (v7x) both TensorCores to be busy.
    while tile > 128 and total_steps(tile) < target_steps:
        tile = max(128, (tile // 2) // 128 * 128)

    # Prefer a tile that divides M exactly (no masked partial last tile /
    # uninitialized padded lanes), searching downward by at most a factor ~2.
    if M % tile != 0:
        t = tile
        floor = max(128, tile // 2)
        while t >= floor:
            if M % t == 0:
                tile = t
                break
            t -= 128
    return tile


# ---------------------------------------------------------------------------
# Wrapper
# ---------------------------------------------------------------------------
def projection_head_forward(x, params, *, tile_m=None, out_dtype=jnp.float32):
    """x: [N, C, D, H, W] float32.  Returns [N, P, D, H, W] of out_dtype."""
    w1, b1, gamma, beta, run_mean, run_var, w2, b2 = (
        params["w1"], params["b1"], params["gamma"], params["beta"],
        params["run_mean"], params["run_var"], params["w2"], params["b2"])

    N, C, D, H, W = x.shape
    P = w2.shape[0]
    eps = 1e-5  # BatchNorm3d default

    # Fold BN (eval mode) into the first 1x1x1 conv:
    #   bn(h) = scale * h + shift  with scale = gamma/sqrt(var+eps),
    #   so  W1f = diag(scale) @ W1,  b1f = scale*b1 + shift.
    bn_scale = gamma / jnp.sqrt(run_var + eps)              # (C,)
    bn_shift = beta - run_mean * bn_scale                   # (C,)
    w1m = w1.reshape(C, C)                                  # (C_out, C_in)
    w2m = w2.reshape(P, C)                                  # (P, C_in)
    w1f = w1m * bn_scale[:, None]                           # (C, C)
    b1f = (b1 * bn_scale + bn_shift).reshape(C, 1)          # (C, 1)
    b2r = b2.reshape(P, 1)                                  # (P, 1)

    # Channels-first voxel matrix: pure reshape, no transpose, no pad.
    M = D * H * W
    x_cm = x.reshape(N, C, M)

    cfg = _GEN_CONFIG.get(_tpu_generation(), _DEFAULT_CONFIG)
    if tile_m is None:
        tile_m = _pick_tile_m(M, N, C, P, cfg["tile_cap"], cfg["vmem_limit"],
                              cfg["target_steps"])
    grid = (N, pl.cdiv(M, tile_m))

    out = pl.pallas_call(
        _proj_head_kernel,
        out_shape=jax.ShapeDtypeStruct((N, P, M), out_dtype),
        grid_spec=pltpu.PrefetchScalarGridSpec(
            num_scalar_prefetch=0,
            grid=grid,
            in_specs=[
                pl.BlockSpec((None, C, tile_m), lambda n, m: (n, 0, m)),  # x tile
                pl.BlockSpec((C, C), lambda n, m: (0, 0)),                # W1 fused
                pl.BlockSpec((C, 1), lambda n, m: (0, 0)),                # b1 fused
                pl.BlockSpec((P, C), lambda n, m: (0, 0)),                # W2
                pl.BlockSpec((P, 1), lambda n, m: (0, 0)),                # b2
            ],
            out_specs=pl.BlockSpec((None, P, tile_m), lambda n, m: (n, 0, m)),
        ),
        compiler_params=pltpu.CompilerParams(
            dimension_semantics=("parallel", "parallel"),
            vmem_limit_bytes=cfg["vmem_limit"]),
    )(x_cm, w1f, b1f, w2m, b2r)

    # Output is already channels-first: pure reshape back to NCDHW.
    return out.reshape(N, P, D, H, W)


# ---------------------------------------------------------------------------
# Params / reference / test
# ---------------------------------------------------------------------------
def make_params(key, dim_in, proj_dim):
    """Deterministic synthetic parameters matching the module's shapes."""
    k1, k2, k3, k4, k5, k6 = jax.random.split(key, 6)
    params = {
        # Conv3d(dim_in, dim_in, 1): weight (out, in, 1, 1, 1), bias (out,)
        "w1": 0.1 * jax.random.normal(k1, (dim_in, dim_in, 1, 1, 1), jnp.float32),
        "b1": 0.1 * jax.random.normal(k2, (dim_in,), jnp.float32),
        # BatchNorm3d(dim_in)
        "gamma": 1.0 + 0.05 * jax.random.normal(k3, (dim_in,), jnp.float32),
        "beta": 0.05 * jax.random.normal(k4, (dim_in,), jnp.float32),
        "run_mean": jnp.zeros((dim_in,), jnp.float32),
        "run_var": jnp.ones((dim_in,), jnp.float32),
        # Conv3d(dim_in, proj_dim, 1)
        "w2": 0.1 * jax.random.normal(k5, (proj_dim, dim_in, 1, 1, 1), jnp.float32),
        "b2": 0.1 * jax.random.normal(k6, (proj_dim,), jnp.float32),
    }
    return params


def _reference(x, params):
    """Pure-JAX reference of the same forward (unfused, transpose-based)."""
    N, C, D, H, W = x.shape
    P = params["w2"].shape[0]
    eps = 1e-5
    w1 = params["w1"].reshape(C, C)
    w2 = params["w2"].reshape(P, C)
    xm = jnp.transpose(x, (0, 2, 3, 4, 1)).reshape(-1, C)
    h = xm @ w1.T + params["b1"]
    scale = params["gamma"] / jnp.sqrt(params["run_var"] + eps)
    shift = params["beta"] - params["run_mean"] * scale
    h = jnp.maximum(h * scale + shift, 0.0)
    y = h @ w2.T + params["b2"]
    y = y / jnp.maximum(jnp.linalg.norm(y, axis=-1, keepdims=True), 1e-12)
    return jnp.transpose(y.reshape(N, D, H, W, P), (0, 4, 1, 2, 3))


if __name__ == "__main__":
    key = jax.random.PRNGKey(0)
    kx, kp = jax.random.split(key)

    # Small shapes: batch=2, dim_in=32, spatial (D,H,W)=(4,8,8) -> M=256, proj_dim=64
    N, C, D, H, W = 2, 32, 4, 8, 8
    P = 64

    x = jax.random.normal(kx, (N, C, D, H, W), jnp.float32)
    params = make_params(kp, C, P)

    out = projection_head_forward(x, params)
    out = jax.block_until_ready(out)

    ref = _reference(x, params)
    assert out.shape == (N, P, D, H, W)
    # Slightly relaxed tolerance: BN folded into W1 + EUP rsqrt vs sqrt/div
    # introduce ~1e-6-level f32 rounding differences on unit-norm outputs.
    assert jnp.allclose(out, ref, atol=1e-4, rtol=1e-4), (
        float(jnp.max(jnp.abs(out - ref))))

    print("KERNEL_OK")
</pallas_src>

<mosaic_0001>
module attributes {stable_mosaic.version = 11 : i64} {
  func.func @_proj_head_kernel(%arg0: i32, %arg1: i32, %arg2: memref<1x32x128xf32, #tpu.memory_space<vmem>>, %arg3: memref<32x32xf32, #tpu.memory_space<vmem>>, %arg4: memref<32x1xf32, #tpu.memory_space<vmem>>, %arg5: memref<64x32xf32, #tpu.memory_space<vmem>>, %arg6: memref<64x1xf32, #tpu.memory_space<vmem>>, %arg7: memref<1x64x128xf32, #tpu.memory_space<vmem>>) attributes {dimension_semantics = [#tpu.dimension_semantics<parallel>, #tpu.dimension_semantics<parallel>], iteration_bounds = array<i64: 2, 2>, scalar_prefetch = 0 : i64, scratch_operands = 0 : i64, tpu.core_type = #tpu.core_type<tc>, window_params = [{transform_indices = @transform_0, window_bounds = array<i64: 1, 32, 128>}, {pipeline_mode = #tpu.pipeline_mode<synchronous>, transform_indices = @transform_1, window_bounds = array<i64: 32, 32>}, {pipeline_mode = #tpu.pipeline_mode<synchronous>, transform_indices = @transform_2, window_bounds = array<i64: 32, 1>}, {pipeline_mode = #tpu.pipeline_mode<synchronous>, transform_indices = @transform_3, window_bounds = array<i64: 64, 32>}, {pipeline_mode = #tpu.pipeline_mode<synchronous>, transform_indices = @transform_4, window_bounds = array<i64: 64, 1>}, {transform_indices = @transform_5, window_bounds = array<i64: 1, 64, 128>}]} {
    %c0 = arith.constant 0 : index
    %c0_0 = arith.constant 0 : index
    %c0_1 = arith.constant 0 : index
    %0 = vector.load %arg2[%c0, %c0_0, %c0_1] : memref<1x32x128xf32, #tpu.memory_space<vmem>>, vector<1x32x128xf32>
    %1 = vector.shape_cast %0 : vector<1x32x128xf32> to vector<32x128xf32>
    %c0_2 = arith.constant 0 : index
    %c0_3 = arith.constant 0 : index
    %2 = vector.load %arg3[%c0_2, %c0_3] : memref<32x32xf32, #tpu.memory_space<vmem>>, vector<32x32xf32>
    %cst = arith.constant dense<0.000000e+00> : vector<32x128xf32>
    %3 = tpu.matmul %2, %1, %cst {dimension_numbers = #tpu.dot_dimension_numbers<[1], [0], [0], [1], [0, 0, 1, 1], [], []>} : vector<32x32xf32>, vector<32x128xf32>, vector<32x128xf32> -> vector<32x128xf32>
    %c0_4 = arith.constant 0 : index
    %c0_5 = arith.constant 0 : index
    %4 = vector.load %arg4[%c0_4, %c0_5] : memref<32x1xf32, #tpu.memory_space<vmem>>, vector<32x1xf32>
    %5 = vector.broadcast %4 : vector<32x1xf32> to vector<32x128xf32>
    %6 = arith.addf %3, %5 : vector<32x128xf32>
    %cst_6 = arith.constant 0.000000e+00 : f32
    %7 = vector.broadcast %cst_6 : f32 to vector<32x128xf32>
    %8 = arith.maximumf %6, %7 : vector<32x128xf32>
    %c0_7 = arith.constant 0 : index
    %c0_8 = arith.constant 0 : index
    %9 = vector.load %arg5[%c0_7, %c0_8] : memref<64x32xf32, #tpu.memory_space<vmem>>, vector<64x32xf32>
    %cst_9 = arith.constant dense<0.000000e+00> : vector<64x128xf32>
    %10 = tpu.matmul %9, %8, %cst_9 {dimension_numbers = #tpu.dot_dimension_numbers<[1], [0], [0], [1], [0, 0, 1, 1], [], []>} : vector<64x32xf32>, vector<32x128xf32>, vector<64x128xf32> -> vector<64x128xf32>
    %c0_10 = arith.constant 0 : index
    %c0_11 = arith.constant 0 : index
    %11 = vector.load %arg6[%c0_10, %c0_11] : memref<64x1xf32, #tpu.memory_space<vmem>>, vector<64x1xf32>
    %12 = vector.broadcast %11 : vector<64x1xf32> to vector<64x128xf32>
    %13 = arith.addf %10, %12 : vector<64x128xf32>
    %14 = arith.mulf %13, %13 : vector<64x128xf32>
    %cst_12 = arith.constant dense<0.000000e+00> : vector<128xf32>
    %15 = vector.multi_reduction <add>, %14, %cst_12 [0] : vector<64x128xf32> to vector<128xf32>
    %16 = vector.shape_cast %15 : vector<128xf32> to vector<1x128xf32>
    %cst_13 = arith.constant 1.000000e-24 : f32
    %17 = vector.broadcast %cst_13 : f32 to vector<1x128xf32>
    %18 = arith.maximumf %16, %17 : vector<1x128xf32>
    %19 = math.rsqrt %18 : vector<1x128xf32>
    %20 = vector.broadcast %19 : vector<1x128xf32> to vector<64x128xf32>
    %21 = arith.mulf %13, %20 : vector<64x128xf32>
    %c0_14 = arith.constant 0 : index
    %c0_15 = arith.constant 0 : index
    %c0_16 = arith.constant 0 : index
    %22 = vector.load %arg7[%c0_14, %c0_15, %c0_16] : memref<1x64x128xf32, #tpu.memory_space<vmem>>, vector<1x64x128xf32>
    %23 = vector.shape_cast %22 : vector<1x64x128xf32> to vector<64x128xf32>
    %24 = vector.shape_cast %21 : vector<64x128xf32> to vector<1x64x128xf32>
    tpu.vector_store %arg7[%c0_14, %c0_15, %c0_16], %24 {strides = array<i32>} : memref<1x64x128xf32, #tpu.memory_space<vmem>>, vector<1x64x128xf32>,
    return
  }
  func.func @transform_0(%arg0: i32, %arg1: i32) -> (i32, i32, i32) {
    %c0_i32 = arith.constant 0 : i32
    %c0_i32_0 = arith.constant 0 : i32
    return %arg0, %c0_i32, %arg1 : i32, i32, i32
  }
  func.func @transform_1(%arg0: i32, %arg1: i32) -> (i32, i32) {
    %c0_i32 = arith.constant 0 : i32
    %c0_i32_0 = arith.constant 0 : i32
    %c0_i32_1 = arith.constant 0 : i32
    return %c0_i32, %c0_i32_0 : i32, i32
  }
  func.func @transform_2(%arg0: i32, %arg1: i32) -> (i32, i32) {
    %c0_i32 = arith.constant 0 : i32
    %c0_i32_0 = arith.constant 0 : i32
    %c0_i32_1 = arith.constant 0 : i32
    return %c0_i32, %c0_i32_0 : i32, i32
  }
  func.func @transform_3(%arg0: i32, %arg1: i32) -> (i32, i32) {
    %c0_i32 = arith.constant 0 : i32
    %c0_i32_0 = arith.constant 0 : i32
    %c0_i32_1 = arith.constant 0 : i32
    return %c0_i32, %c0_i32_0 : i32, i32
  }
  func.func @transform_4(%arg0: i32, %arg1: i32) -> (i32, i32) {
    %c0_i32 = arith.constant 0 : i32
    %c0_i32_0 = arith.constant 0 : i32
    %c0_i32_1 = arith.constant 0 : i32
    return %c0_i32, %c0_i32_0 : i32, i32
  }
  func.func @transform_5(%arg0: i32, %arg1: i32) -> (i32, i32, i32) {
    %c0_i32 = arith.constant 0 : i32
    %c0_i32_0 = arith.constant 0 : i32
    return %arg0, %c0_i32, %arg1 : i32, i32, i32
  }
}

</mosaic_0001>

<llo_original>
// kernel: tpu_custom_call.1
$region0: #{tpu_custom_call.1}
  #allocation0 [shape = 'u32[]', space=smem, size = 0x4, offset = 0x4, fixed_abs, tag = 'smem constant byte address 0x4 - core index']
  #allocation1 [shape = 'u32[144,128]{1,0:T(1,128)}', space=vmem, size = 0x12000, scoped, tag = 'internal scratch']
  %s0 = inlined_call_operand.vmem [shape: f32[2,32,256], index: 0, kind: input, shape index: {}]
  %s1 = inlined_call_operand.vmem [shape: f32[32,32], index: 1, kind: input, shape index: {}]
  %s2 = inlined_call_operand.vmem [shape: f32[32,1], index: 2, kind: input, shape index: {}]
  %s3 = inlined_call_operand.vmem [shape: f32[64,32], index: 3, kind: input, shape index: {}]
  %s4 = inlined_call_operand.vmem [shape: f32[64,1], index: 4, kind: input, shape index: {}]
  %s5 = inlined_call_operand.hbm [shape: f32[2,64,256], index: 5, kind: output, shape index: {}]
  %s6 = sld [smem:[#allocation0]]
  $region91: #{tpu_custom_call.1} parent=0
    _
  %s8 = ssub.s32 1, %s6
  %s9 = scalar_select 0, %s8, %s6
  $region1: #{tpu_custom_call.1} parent=0
    #allocation2 [shape = 'u8[32768]{0}', space=vmem, size = 0x8000, scoped, tag = 'input window, operand 0']
    #allocation3 [shape = 'u8[65536]{0}', space=vmem, size = 0x10000, scoped, tag = 'output window, operand 0']
    #allocation4 [shape = 's32[2]{0}', space=sflag, size = 0x8, scoped, tag = 'scoped memory for tpu_custom_call.1']
    %10 = vsyncpa [#allocation4], 0
    %s11 = scalar_lea.sflag [#allocation4], 1
    %12 = vsyncpa %s11, 0
    loop: start=0, step=1, limit=6
    $region2: #{tpu_custom_call.1} parent=1 // loop_pre_header
      _
    $region3: #{tpu_custom_call.1} parent=1 // loop_header
      %s14 = sphi 0, %s18
      %p15 = scmp.ge.s32.totalorder %s14, 6
      %s21 = sphi 0, %s33
      %s22 = sphi 0, %s29
      %s23 = sphi 0, %s21
      %s24 = sphi 0, %s22
      %s25 = sphi 0, %s23
      %s26 = sphi 0, %s24
      %s38 = sphi 0, %s40
      %s41 = sphi 0, %s38
      %s42 = sphi 0, %s41
      %s58 = sphi 0, %s42
      %s62 = sphi 0, %s62
      %s64 = sphi 0, %s62
      %s65 = sphi 0, %s64
      %s79 = sphi 0, %s65
      %s83 = sphi 0, %s83
      %s85 = sphi 0, %s83
      %s86 = sphi 0, %s85
      %s100 = sphi 0, %s86
      %s104 = sphi 0, %s104
      %s106 = sphi 0, %s104
      %s107 = sphi 0, %s106
      %s121 = sphi 0, %s107
      %s125 = sphi 0, %s125
      %s127 = sphi 0, %s125
      %s128 = sphi 0, %s127
      %s142 = sphi 0, %s128
      %s150 = sphi 0, %s152
      %s153 = sphi 0, %s150
      %s154 = sphi 0, %s153
      %s170 = sphi 0, %s154
    $region4: #{tpu_custom_call.1} parent=1 // loop_header_branch
      %17 = sbr.rel (%p15) target = $region8
    $region5: #{tpu_custom_call.1} parent=1 // loop_body
      %s19 = ssub.s32 %s14, 1
      %s20 = ssub.s32 %s14, 2
      %s27 = sadd.s32 1, %s22
      %p28 = scmp.ge.s32.totalorder %s27, 2
      %s29 = scalar_select %p28, 0, %s27
      %s30 = sadd.s32 1, %s21
      %s31 = scalar_select %p28, %s30, %s21
      %p32 = scmp.ge.s32.totalorder %s31, 2
      %s33 = scalar_select %p32, 0, %s31
      %s34 = ssub.s32 %s21, %s33
      %s35 = ssub.s32 %s22, %s29
      %s36 = sor.u32 %s34, %s35
      %p37 = scmp.eq.s32.totalorder %s36, 0
      %s39 = sadd.s32 %s38, 1
      %s40 = scalar_select %p37, %s38, %s39
      %p43 = pneg %p37
      %p44 = scmp.eq.s32.totalorder %s14, 3
      %p45 = por %p43, %p44
      %p46 = scmp.ne.s32.totalorder %s38, %s41
      %p47 = scmp.eq.s32.totalorder %s14, 0
      %p48 = por %p46, %p47
      %p49 = scmp.ne.s32.totalorder %s38, %s41
      %p50 = scmp.eq.s32.totalorder %s19, 3
      %p51 = por %p49, %p50
      %p52 = scmp.ne.s32.totalorder %s41, %s42
      %p53 = scmp.eq.s32.totalorder %s19, 0
      %p54 = por %p52, %p53
      %p55 = scmp.ne.s32.totalorder %s41, %s42
      %p56 = scmp.eq.s32.totalorder %s20, 3
      %p57 = por %p55, %p56
      %p59 = scmp.ne.s32.totalorder %s42, %s58
      %p60 = scmp.eq.s32.totalorder %s20, 0
      %p61 = por %p59, %p60
      %s63 = sadd.s32 %s62, 1
      %p66 = scmp.eq.s32.totalorder %s14, 3
      %p67 = scmp.ne.s32.totalorder %s62, %s64
      %p68 = scmp.eq.s32.totalorder %s14, 0
      %p69 = por %p67, %p68
      %p70 = scmp.ne.s32.totalorder %s62, %s64
      %p71 = scmp.eq.s32.totalorder %s19, 3
      %p72 = por %p70, %p71
      %p73 = scmp.ne.s32.totalorder %s64, %s65
      %p74 = scmp.eq.s32.totalorder %s19, 0
      %p75 = por %p73, %p74
      %p76 = scmp.ne.s32.totalorder %s64, %s65
      %p77 = scmp.eq.s32.totalorder %s20, 3
      %p78 = por %p76, %p77
      %p80 = scmp.ne.s32.totalorder %s65, %s79
      %p81 = scmp.eq.s32.totalorder %s20, 0
      %p82 = por %p80, %p81
      %s84 = sadd.s32 %s83, 1
      %p87 = scmp.eq.s32.totalorder %s14, 3
      %p88 = scmp.ne.s32.totalorder %s83, %s85
      %p89 = scmp.eq.s32.totalorder %s14, 0
      %p90 = por %p88, %p89
      %p91 = scmp.ne.s32.totalorder %s83, %s85
      %p92 = scmp.eq.s32.totalorder %s19, 3
      %p93 = por %p91, %p92
      %p94 = scmp.ne.s32.totalorder %s85, %s86
      %p95 = scmp.eq.s32.totalorder %s19, 0
      %p96 = por %p94, %p95
      %p97 = scmp.ne.s32.totalorder %s85, %s86
      %p98 = scmp.eq.s32.totalorder %s20, 3
      %p99 = por %p97, %p98
      %p101 = scmp.ne.s32.totalorder %s86, %s100
      %p102 = scmp.eq.s32.totalorder %s20, 0
      %p103 = por %p101, %p102
      %s105 = sadd.s32 %s104, 1
      %p108 = scmp.eq.s32.totalorder %s14, 3
      %p109 = scmp.ne.s32.totalorder %s104, %s106
      %p110 = scmp.eq.s32.totalorder %s14, 0
      %p111 = por %p109, %p110
      %p112 = scmp.ne.s32.totalorder %s104, %s106
      %p113 = scmp.eq.s32.totalorder %s19, 3
      %p114 = por %p112, %p113
      %p115 = scmp.ne.s32.totalorder %s106, %s107
      %p116 = scmp.eq.s32.totalorder %s19, 0
      %p117 = por %p115, %p116
      %p118 = scmp.ne.s32.totalorder %s106, %s107
      %p119 = scmp.eq.s32.totalorder %s20, 3
      %p120 = por %p118, %p119
      %p122 = scmp.ne.s32.totalorder %s107, %s121
      %p123 = scmp.eq.s32.totalorder %s20, 0
      %p124 = por %p122, %p123
      %s126 = sadd.s32 %s125, 1
      %p129 = scmp.eq.s32.totalorder %s14, 3
      %p130 = scmp.ne.s32.totalorder %s125, %s127
      %p131 = scmp.eq.s32.totalorder %s14, 0
      %p132 = por %p130, %p131
      %p133 = scmp.ne.s32.totalorder %s125, %s127
      %p134 = scmp.eq.s32.totalorder %s19, 3
      %p135 = por %p133, %p134
      %p136 = scmp.ne.s32.totalorder %s127, %s128
      %p137 = scmp.eq.s32.totalorder %s19, 0
      %p138 = por %p136, %p137
      %p139 = scmp.ne.s32.totalorder %s127, %s128
      %p140 = scmp.eq.s32.totalorder %s20, 3
      %p141 = por %p139, %p140
      %p143 = scmp.ne.s32.totalorder %s128, %s142
      %p144 = scmp.eq.s32.totalorder %s20, 0
      %p145 = por %p143, %p144
      %s146 = ssub.s32 %s21, %s33
      %s147 = ssub.s32 %s22, %s29
      %s148 = sor.u32 %s146, %s147
      %p149 = scmp.eq.s32.totalorder %s148, 0
      %s151 = sadd.s32 %s150, 1
      %s152 = scalar_select %p149, %s150, %s151
      %p155 = pneg %p149
      %p156 = scmp.eq.s32.totalorder %s14, 3
      %p157 = por %p155, %p156
      %p158 = scmp.ne.s32.totalorder %s150, %s153
      %p159 = scmp.eq.s32.totalorder %s14, 0
      %p160 = por %p158, %p159
      %p161 = scmp.ne.s32.totalorder %s150, %s153
      %p162 = scmp.eq.s32.totalorder %s19, 3
      %p163 = por %p161, %p162
      %p164 = scmp.ne.s32.totalorder %s153, %s154
      %p165 = scmp.eq.s32.totalorder %s19, 0
      %p166 = por %p164, %p165
      %p167 = scmp.ne.s32.totalorder %s153, %s154
      %p168 = scmp.eq.s32.totalorder %s20, 3
      %p169 = por %p167, %p168
      %p171 = scmp.ne.s32.totalorder %s154, %s170
      %p172 = scmp.eq.s32.totalorder %s20, 0
      %p173 = por %p171, %p172
      %p174 = scmp.le.s32.totalorder 1, %s14
      %p175 = scmp.lt.s32.totalorder %s14, 5
      %p176 = pnand %p174, %p175
      %p177 = pneg %p176
      // Predicated region
      $region9: #{tpu_custom_call.1} parent=5 // pred_check
        _
      $region10: #{tpu_custom_call.1} parent=5 // pred_check_branch
        %179 = sbr.rel (%p176) target = $region12
      $region11: #{tpu_custom_call.1} parent=5 // pred_region
        %s180 = ssub.s32 %s14, 1
        // Predicated region
        $region13: #{tpu_custom_call.1} parent=11 // pred_check
          %p181 = pneg %p75
        $region14: #{tpu_custom_call.1} parent=11 // pred_check_branch
          %183 = sbr.rel (%p181) target = $region16
        $region15: #{tpu_custom_call.1} parent=11 // pred_region
          _
        $region16: #{tpu_custom_call.1} parent=11 // pred_fallthru
          _
        // Predicated region
        $region17: #{tpu_custom_call.1} parent=11 // pred_check
          %p184 = pneg %p96
        $region18: #{tpu_custom_call.1} parent=11 // pred_check_branch
          %186 = sbr.rel (%p184) target = $region20
        $region19: #{tpu_custom_call.1} parent=11 // pred_region
          _
        $region20: #{tpu_custom_call.1} parent=11 // pred_fallthru
          _
        // Predicated region
        $region21: #{tpu_custom_call.1} parent=11 // pred_check
          %p187 = pneg %p117
        $region22: #{tpu_custom_call.1} parent=11 // pred_check_branch
          %189 = sbr.rel (%p187) target = $region24
        $region23: #{tpu_custom_call.1} parent=11 // pred_region
          _
        $region24: #{tpu_custom_call.1} parent=11 // pred_fallthru
          _
        // Predicated region
        $region25: #{tpu_custom_call.1} parent=11 // pred_check
          %p190 = pneg %p138
        $region26: #{tpu_custom_call.1} parent=11 // pred_check_branch
          %192 = sbr.rel (%p190) target = $region28
        $region27: #{tpu_custom_call.1} parent=11 // pred_region
          _
        $region28: #{tpu_custom_call.1} parent=11 // pred_fallthru
          _
      $region12: #{tpu_custom_call.1} parent=5 // pred_fallthru
        _
      %p193 = scmp.lt.s32.totalorder %s14, 4
      // Predicated region
      $region29: #{tpu_custom_call.1} parent=5 // pred_check
        %p194 = pneg %p193
      $region30: #{tpu_custom_call.1} parent=5 // pred_check_branch
        %196 = sbr.rel (%p194) target = $region32
      $region31: #{tpu_custom_call.1} parent=5 // pred_region
        // Predicated region
        $region33: #{tpu_custom_call.1} parent=31 // pred_check
          %p197 = pneg %p48
        $region34: #{tpu_custom_call.1} parent=31 // pred_check_branch
          %199 = sbr.rel (%p197) target = $region36
        $region35: #{tpu_custom_call.1} parent=31 // pred_region
          %s200 = sand.u32 %s38, 1
          %s201 = sand.u32 %s38, 1
          %s202 = smul.addr %s201, 32
          %s203 = scalar_lea.vmem [#allocation2], %s202
          %s204 = smul.addr %s21, 8
          %s205 = sadd.s32 %s22, %s204
          %s206 = smul.addr %s205, 8
          %s207 = scalar_lea.vmem %s0, %s206
          // Predicated region
          $region37: #{tpu_custom_call.1} parent=35 // pred_check
            _
          $region38: #{tpu_custom_call.1} parent=35 // pred_check_branch
            %209 = sbr.rel (0) target = $region40
          $region39: #{tpu_custom_call.1} parent=35 // pred_region
            // Predicated region
            $region41: #{tpu_custom_call.1} parent=39 // pred_check
              _
            $region42: #{tpu_custom_call.1} parent=39 // pred_check_branch
              %211 = sbr.rel (0) target = $region44
            $region43: #{tpu_custom_call.1} parent=39 // pred_region
              // Predicated region
              $region56: #{tpu_custom_call.1} parent=43 // pred_check
                _
              $region57: #{tpu_custom_call.1} parent=43 // pred_check_branch
                %232 = sbr.rel (0) target = $region59
              $region58: #{tpu_custom_call.1} parent=43 // pred_region
                loop: start=0, step=1, limit=1
                $region60: #{tpu_custom_call.1} parent=58 // loop_pre_header
                  _
                $region61: #{tpu_custom_call.1} parent=58 // loop_header
                  %s234 = sphi 0, %s238
                  %p235 = scmp.ge.s32.totalorder %s234, 1
                  %s239 = sphi %s207, %s207
                  %s240 = sphi %s203, %s203
                $region62: #{tpu_custom_call.1} parent=58 // loop_header_branch
                  %237 = sbr.rel (%p235) target = $region66
                $region63: #{tpu_custom_call.1} parent=58 // loop_body
                  %v241 = vld [vmem:[%s239] sm:$0xff]
                  %242 = vst [vmem:[%s240] sm:$0xff] %v241
                  %v243 = vld [vmem:[%s239 + $0x10] sm:$0xff]
                  %244 = vst [vmem:[%s240 + $0x8] sm:$0xff] %v243
                  %v245 = vld [vmem:[%s239 + $0x20] sm:$0xff]
                  %246 = vst [vmem:[%s240 + $0x10] sm:$0xff] %v245
                  %v247 = vld [vmem:[%s239 + $0x30] sm:$0xff]
                  %248 = vst [vmem:[%s240 + $0x18] sm:$0xff] %v247
                $region64: #{tpu_custom_call.1} parent=58 // loop_footer
                  %s238 = sadd.s32 1, %s234
                $region65: #{tpu_custom_call.1} parent=58 // loop_footer_branch
                  %233 = sbr.rel target = $region61
                $region66: #{tpu_custom_call.1} parent=58 // loop_exit
                  _
              $region59: #{tpu_custom_call.1} parent=43 // pred_fallthru
                _
              // Predicated region
              $region67: #{tpu_custom_call.1} parent=43 // pred_check
                _
              $region68: #{tpu_custom_call.1} parent=43 // pred_check_branch
                %250 = sbr.rel target = $region70
              $region69: #{tpu_custom_call.1} parent=43 // pred_region
                _
              $region70: #{tpu_custom_call.1} parent=43 // pred_fallthru
                _
            $region44: #{tpu_custom_call.1} parent=39 // pred_fallthru
              _
            // Predicated region
            $region45: #{tpu_custom_call.1} parent=39 // pred_check
              _
            $region46: #{tpu_custom_call.1} parent=39 // pred_check_branch
              %213 = sbr.rel target = $region48
            $region47: #{tpu_custom_call.1} parent=39 // pred_region
              loop: start=0, step=1, limit=1
              $region49: #{tpu_custom_call.1} parent=47 // loop_pre_header
                _
              $region50: #{tpu_custom_call.1} parent=47 // loop_header
                %s216 = sphi 0, %s220
                %p217 = scmp.ge.s32.totalorder %s216, 1
                %s221 = sphi %s207, %s207
                %s222 = sphi %s203, %s203
              $region51: #{tpu_custom_call.1} parent=47 // loop_header_branch
                %219 = sbr.rel (%p217) target = $region55
              $region52: #{tpu_custom_call.1} parent=47 // loop_body
                %v223 = vld [vmem:[%s221] sm:$0xff]
                %224 = vst [vmem:[%s222] sm:$0xff] %v223
                %v225 = vld [vmem:[%s221 + $0x10] sm:$0xff]
                %226 = vst [vmem:[%s222 + $0x8] sm:$0xff] %v225
                %v227 = vld [vmem:[%s221 + $0x20] sm:$0xff]
                %228 = vst [vmem:[%s222 + $0x10] sm:$0xff] %v227
                %v229 = vld [vmem:[%s221 + $0x30] sm:$0xff]
                %230 = vst [vmem:[%s222 + $0x18] sm:$0xff] %v229
              $region53: #{tpu_custom_call.1} parent=47 // loop_footer
                %s220 = sadd.s32 1, %s216
              $region54: #{tpu_custom_call.1} parent=47 // loop_footer_branch
                %215 = sbr.rel target = $region50
              $region55: #{tpu_custom_call.1} parent=47 // loop_exit
                _
            $region48: #{tpu_custom_call.1} parent=39 // pred_fallthru
              _
          $region40: #{tpu_custom_call.1} parent=35 // pred_fallthru
            _
          %251 = vnop
        $region36: #{tpu_custom_call.1} parent=31 // pred_fallthru
          _
      $region32: #{tpu_custom_call.1} parent=5 // pred_fallthru
        _
      %p252 = scmp.le.s32.totalorder 1, %s14
      %p253 = scmp.lt.s32.totalorder %s14, 5
      %p254 = pnand %p252, %p253
      %p255 = pneg %p254
      // Predicated region
      $region71: #{tpu_custom_call.1} parent=5 // pred_check
        _
      $region72: #{tpu_custom_call.1} parent=5 // pred_check_branch
        %257 = sbr.rel (%p254) target = $region74
      $region73: #{tpu_custom_call.1} parent=5 // pred_region
        %s258 = ssub.s32 %s14, 1
        %s259 = sand.u32 %s41, 1
        %s260 = sand.u32 %s41, 1
        %s261 = smul.addr %s260, 32
        %s262 = scalar_lea.vmem [#allocation2], %s261
        // Predicated region
        $region75: #{tpu_custom_call.1} parent=73 // pred_check
          %p263 = pneg %p54
        $region76: #{tpu_custom_call.1} parent=73 // pred_check_branch
          %265 = sbr.rel (%p263) target = $region78
        $region77: #{tpu_custom_call.1} parent=73 // pred_region
          _
        $region78: #{tpu_custom_call.1} parent=73 // pred_fallthru
          _
        %s266 = sand.u32 %s41, 1
        %s267 = sand.u32 %s41, 1
        %s268 = smul.addr %s267, 32
        %s269 = scalar_lea.vmem [#allocation2], %s268
        %p270 = pneg %p54
        %p271 = pneg %p51
        %p272 = pneg %p75
        %p273 = pneg %p72
        %p274 = pneg %p96
        %p275 = pneg %p93
        %p276 = pneg %p117
        %p277 = pneg %p114
        %p278 = pneg %p138
        %p279 = pneg %p135
        %p280 = pneg %p166
        %p281 = pneg %p163
        %s282 = sand.u32 %s153, 1
        %s283 = scalar_lea.sflag [#allocation4], %s282
        %s284 = sand.u32 %s153, 1
        %s285 = smul.addr %s284, 64
        %s286 = scalar_lea.vmem [#allocation3], %s285
        %v287 = vld [vmem:[%s262] sm:$0xff]
        %v288 = vld [vmem:[%s262 + $0x8] sm:$0xff]
        %v289 = vld [vmem:[%s262 + $0x10] sm:$0xff]
        %v290 = vld [vmem:[%s262 + $0x18] sm:$0xff]
        %v291 = vld [vmem:[%s1] sm:$0xff]
        %v292 = vld [vmem:[%s1 + $0x8] sm:$0xff]
        %v293 = vld [vmem:[%s1 + $0x10] sm:$0xff]
        %v294 = vld [vmem:[%s1 + $0x18] sm:$0xff]
        %v295 = vld [vmem:[%s2] sm:$0xff]
        %v296 = vld [vmem:[%s2 + $0x8] sm:$0xff]
        %v297 = vld [vmem:[%s2 + $0x10] sm:$0xff]
        %v298 = vld [vmem:[%s2 + $0x18] sm:$0xff]
        %300 = vset.pattern.permute.xlu0 0
        %301 = vperm.xlu0 %300, %v295
        %v302 = vpop.permute.xlu0 %301
        %305 = vset.pattern.permute.xlu0 0
        %306 = vperm.xlu0 %305, %v296
        %v307 = vpop.permute.xlu0 %306
        %310 = vset.pattern.permute.xlu0 0
        %311 = vperm.xlu0 %310, %v297
        %v312 = vpop.permute.xlu0 %311
        %315 = vset.pattern.permute.xlu0 0
        %316 = vperm.xlu0 %315, %v298
        %v317 = vpop.permute.xlu0 %316
        %vm319 = vcmask 261120
        %v321 = vsel %vm319, %v291, 0
        %v324 = vsel %vm319, %v292, 0
        %v327 = vsel %vm319, %v293, 0
        %v330 = vsel %vm319, %v294, 0
        %332 = vmatprep.subr.mxu0 0.0
        %333 = vmatpush1.msra.mxu0 %v287
        %334 = vmatprep.subr.mxu0 0.0
        %335 = vmatpush1.msra.mxu0 %v288
        %336 = vmatprep.subr.mxu0 0.0
        %337 = vmatpush1.msra.mxu0 %v289
        %338 = vmatprep.subr.mxu0 0.0
        %339 = vmatpush1.msra.mxu0 %v290
        %340 = vmatprep.subr.mxu0 0.0
        %341 = vmatpush1.msra.mxu0 0.0
        %342 = vmatprep.subr.mxu0 0.0
        %343 = vmatpush1.msra.mxu0 0.0
        %344 = vmatprep.subr.mxu0 0.0
        %345 = vmatpush1.msra.mxu0 0.0
        %346 = vmatprep.subr.mxu0 0.0
        %347 = vmatpush1.msra.mxu0 0.0
        %348 = vmatprep.subr.mxu0 0.0
        %349 = vmatpush1.msra.mxu0 0.0
        %350 = vmatprep.subr.mxu0 0.0
        %351 = vmatpush1.msra.mxu0 0.0
        %352 = vmatprep.subr.mxu0 0.0
        %353 = vmatpush1.msra.mxu0 0.0
        %354 = vmatprep.subr.mxu0 0.0
        %355 = vmatpush1.msra.mxu0 0.0
        %356 = vmatprep.subr.mxu0 0.0
        %357 = vmatpush1.msra.mxu0 0.0
        %358 = vmatprep.subr.mxu0 0.0
        %359 = vmatpush1.msra.mxu0 0.0
        %360 = vmatprep.subr.mxu0 0.0
        %361 = vmatpush1.msra.mxu0 0.0
        %362 = vmatprep.subr.mxu0 0.0
        %363 = vmatpush1.msra.mxu0 0.0
        %364 = vmatprep.subr.mxu0 0.0
        %365 = vmatpush1.msra.mxu0 0.0
        %366 = vmatprep.subr.mxu0 0.0
        %367 = vmatpush1.msra.mxu0 0.0
        %368 = vmatprep.subr.mxu0 0.0
        %369 = vmatpush1.msra.mxu0 0.0
        %370 = vmatprep.subr.mxu0 0.0
        %371 = vmatpush1.msra.mxu0 0.0
        %372 = vmatprep.subr.mxu0 0.0
        %373 = vmatpush1.msra.mxu0 0.0
        %374 = vmatprep.subr.mxu0 0.0
        %375 = vmatpush1.msra.mxu0 0.0
        %376 = vmatprep.subr.mxu0 0.0
        %377 = vmatpush1.msra.mxu0 0.0
        %378 = vmatprep.subr.mxu0 0.0
        %379 = vmatpush1.msra.mxu0 0.0
        %380 = vmatprep.subr.mxu0 0.0
        %381 = vmatpush1.msra.mxu0 0.0
        %382 = vmatprep.subr.mxu0 0.0
        %383 = vmatpush1.msra.mxu0 0.0
        %384 = vmatprep.subr.mxu0 0.0
        %385 = vmatpush1.msra.mxu0 0.0
        %386 = vmatprep.subr.mxu0 0.0
        %387 = vmatpush1.msra.mxu0 0.0
        %388 = vmatprep.subr.mxu0 0.0
        %389 = vmatpush1.msra.mxu0 0.0
        %390 = vmatprep.subr.mxu0 0.0
        %391 = vmatpush1.msra.mxu0 0.0
        %392 = vmatprep.subr.mxu0 0.0
        %393 = vmatpush1.msra.mxu0 0.0
        %394 = vmatprep.subr.mxu0 0.0
        %395 = vmatpush1.msra.mxu0 0.0
        %396 = vmatprep.mubr.f32.mxu0 0.0
        %397 = vmatmul.mubr.f32.gmra.mrb[0].mxu0 %v321
        %v398 = vpop.f32.mrb[0].mxu0
        %v399 = vadd.f32 %v302, %v398
        %v400 = vpop.f32.mrb[0].mxu0
        %401 = vmatprep.mubr.f32.mxu0 0.0
        %402 = vmatmul.mubr.f32.gmra.mrb[0].mxu0 %v324
        %v403 = vpop.f32.mrb[0].mxu0
        %v404 = vadd.f32 %v307, %v403
        %v405 = vpop.f32.mrb[0].mxu0
        %406 = vmatprep.mubr.f32.mxu0 0.0
        %407 = vmatmul.mubr.f32.gmra.mrb[0].mxu0 %v327
        %v408 = vpop.f32.mrb[0].mxu0
        %v409 = vadd.f32 %v312, %v408
        %v410 = vpop.f32.mrb[0].mxu0
        %411 = vmatprep.mubr.f32.mxu0 0.0
        %412 = vmatmul.mubr.f32.gmra.mrb[0].mxu0 %v330
        %v413 = vpop.f32.mrb[0].mxu0
        %v414 = vadd.f32 %v317, %v413
        %v415 = vpop.f32.mrb[0].mxu0
        %416 = vdwg.mxu0
        %v417 = vmax.f32 %v399, 0.0
        %v418 = vmax.f32 %v404, 0.0
        %v419 = vmax.f32 %v409, 0.0
        %v420 = vmax.f32 %v414, 0.0
        %v421 = vld [vmem:[%s3] sm:$0xff]
        %v422 = vld [vmem:[%s3 + $0x8] sm:$0xff]
        %v423 = vld [vmem:[%s3 + $0x10] sm:$0xff]
        %v424 = vld [vmem:[%s3 + $0x18] sm:$0xff]
        %v425 = vld [vmem:[%s3 + $0x20] sm:$0xff]
        %v426 = vld [vmem:[%s3 + $0x28] sm:$0xff]
        %v427 = vld [vmem:[%s3 + $0x30] sm:$0xff]
        %v428 = vld [vmem:[%s3 + $0x38] sm:$0xff]
        %v429 = vld [vmem:[%s4] sm:$0xff]
        %v430 = vld [vmem:[%s4 + $0x8] sm:$0xff]
        %v431 = vld [vmem:[%s4 + $0x10] sm:$0xff]
        %v432 = vld [vmem:[%s4 + $0x18] sm:$0xff]
        %v433 = vld [vmem:[%s4 + $0x20] sm:$0xff]
        %v434 = vld [vmem:[%s4 + $0x28] sm:$0xff]
        %v435 = vld [vmem:[%s4 + $0x30] sm:$0xff]
        %v436 = vld [vmem:[%s4 + $0x38] sm:$0xff]
        %438 = vset.pattern.permute.xlu0 0
        %439 = vperm.xlu0 %438, %v429
        %v440 = vpop.permute.xlu0 %439
        %443 = vset.pattern.permute.xlu0 0
        %444 = vperm.xlu0 %443, %v430
        %v445 = vpop.permute.xlu0 %444
        %448 = vset.pattern.permute.xlu0 0
        %449 = vperm.xlu0 %448, %v431
        %v450 = vpop.permute.xlu0 %449
        %453 = vset.pattern.permute.xlu0 0
        %454 = vperm.xlu0 %453, %v432
        %v455 = vpop.permute.xlu0 %454
        %458 = vset.pattern.permute.xlu0 0
        %459 = vperm.xlu0 %458, %v433
        %v460 = vpop.permute.xlu0 %459
        %463 = vset.pattern.permute.xlu0 0
        %464 = vperm.xlu0 %463, %v434
        %v465 = vpop.permute.xlu0 %464
        %468 = vset.pattern.permute.xlu0 0
        %469 = vperm.xlu0 %468, %v435
        %v470 = vpop.permute.xlu0 %469
        %473 = vset.pattern.permute.xlu0 0
        %474 = vperm.xlu0 %473, %v436
        %v475 = vpop.permute.xlu0 %474
        %v478 = vsel %vm319, %v421, 0
        %v481 = vsel %vm319, %v422, 0
        %v484 = vsel %vm319, %v423, 0
        %v487 = vsel %vm319, %v424, 0
        %v490 = vsel %vm319, %v425, 0
        %v493 = vsel %vm319, %v426, 0
        %v496 = vsel %vm319, %v427, 0
        %v499 = vsel %vm319, %v428, 0
        %501 = vmatprep.subr.mxu0 0.0
        %502 = vmatpush1.msra.mxu0 %v417
        %503 = vmatprep.subr.mxu0 0.0
        %504 = vmatpush1.msra.mxu0 %v418
        %505 = vmatprep.subr.mxu0 0.0
        %506 = vmatpush1.msra.mxu0 %v419
        %507 = vmatprep.subr.mxu0 0.0
        %508 = vmatpush1.msra.mxu0 %v420
        %509 = vmatprep.subr.mxu0 0.0
        %510 = vmatpush1.msra.mxu0 0.0
        %511 = vmatprep.subr.mxu0 0.0
        %512 = vmatpush1.msra.mxu0 0.0
        %513 = vmatprep.subr.mxu0 0.0
        %514 = vmatpush1.msra.mxu0 0.0
        %515 = vmatprep.subr.mxu0 0.0
        %516 = vmatpush1.msra.mxu0 0.0
        %517 = vmatprep.subr.mxu0 0.0
        %518 = vmatpush1.msra.mxu0 0.0
        %519 = vmatprep.subr.mxu0 0.0
        %520 = vmatpush1.msra.mxu0 0.0
        %521 = vmatprep.subr.mxu0 0.0
        %522 = vmatpush1.msra.mxu0 0.0
        %523 = vmatprep.subr.mxu0 0.0
        %524 = vmatpush1.msra.mxu0 0.0
        %525 = vmatprep.subr.mxu0 0.0
        %526 = vmatpush1.msra.mxu0 0.0
        %527 = vmatprep.subr.mxu0 0.0
        %528 = vmatpush1.msra.mxu0 0.0
        %529 = vmatprep.subr.mxu0 0.0
        %530 = vmatpush1.msra.mxu0 0.0
        %531 = vmatprep.subr.mxu0 0.0
        %532 = vmatpush1.msra.mxu0 0.0
        %533 = vmatprep.subr.mxu0 0.0
        %534 = vmatpush1.msra.mxu0 0.0
        %535 = vmatprep.subr.mxu0 0.0
        %536 = vmatpush1.msra.mxu0 0.0
        %537 = vmatprep.subr.mxu0 0.0
        %538 = vmatpush1.msra.mxu0 0.0
        %539 = vmatprep.subr.mxu0 0.0
        %540 = vmatpush1.msra.mxu0 0.0
        %541 = vmatprep.subr.mxu0 0.0
        %542 = vmatpush1.msra.mxu0 0.0
        %543 = vmatprep.subr.mxu0 0.0
        %544 = vmatpush1.msra.mxu0 0.0
        %545 = vmatprep.subr.mxu0 0.0
        %546 = vmatpush1.msra.mxu0 0.0
        %547 = vmatprep.subr.mxu0 0.0
        %548 = vmatpush1.msra.mxu0 0.0
        %549 = vmatprep.subr.mxu0 0.0
        %550 = vmatpush1.msra.mxu0 0.0
        %551 = vmatprep.subr.mxu0 0.0
        %552 = vmatpush1.msra.mxu0 0.0
        %553 = vmatprep.subr.mxu0 0.0
        %554 = vmatpush1.msra.mxu0 0.0
        %555 = vmatprep.subr.mxu0 0.0
        %556 = vmatpush1.msra.mxu0 0.0
        %557 = vmatprep.subr.mxu0 0.0
        %558 = vmatpush1.msra.mxu0 0.0
        %559 = vmatprep.subr.mxu0 0.0
        %560 = vmatpush1.msra.mxu0 0.0
        %561 = vmatprep.subr.mxu0 0.0
        %562 = vmatpush1.msra.mxu0 0.0
        %563 = vmatprep.subr.mxu0 0.0
        %564 = vmatpush1.msra.mxu0 0.0
        %565 = vmatprep.mubr.f32.mxu0 0.0
        %566 = vmatmul.mubr.f32.gmra.mrb[0].mxu0 %v478
        %v567 = vpop.f32.mrb[0].mxu0
        %v568 = vadd.f32 %v440, %v567
        %v569 = vpop.f32.mrb[0].mxu0
        %570 = vmatprep.mubr.f32.mxu0 0.0
        %571 = vmatmul.mubr.f32.gmra.mrb[0].mxu0 %v481
        %v572 = vpop.f32.mrb[0].mxu0
        %v573 = vadd.f32 %v445, %v572
        %v574 = vpop.f32.mrb[0].mxu0
        %575 = vmatprep.mubr.f32.mxu0 0.0
        %576 = vmatmul.mubr.f32.gmra.mrb[0].mxu0 %v484
        %v577 = vpop.f32.mrb[0].mxu0
        %v578 = vadd.f32 %v450, %v577
        %v579 = vpop.f32.mrb[0].mxu0
        %580 = vmatprep.mubr.f32.mxu0 0.0
        %581 = vmatmul.mubr.f32.gmra.mrb[0].mxu0 %v487
        %v582 = vpop.f32.mrb[0].mxu0
        %v583 = vadd.f32 %v455, %v582
        %v584 = vpop.f32.mrb[0].mxu0
        %585 = vmatprep.mubr.f32.mxu0 0.0
        %586 = vmatmul.mubr.f32.gmra.mrb[0].mxu0 %v490
        %v587 = vpop.f32.mrb[0].mxu0
        %v588 = vadd.f32 %v460, %v587
        %v589 = vpop.f32.mrb[0].mxu0
        %590 = vmatprep.mubr.f32.mxu0 0.0
        %591 = vmatmul.mubr.f32.gmra.mrb[0].mxu0 %v493
        %v592 = vpop.f32.mrb[0].mxu0
        %v593 = vadd.f32 %v465, %v592
        %v594 = vpop.f32.mrb[0].mxu0
        %595 = vmatprep.mubr.f32.mxu0 0.0
        %596 = vmatmul.mubr.f32.gmra.mrb[0].mxu0 %v496
        %v597 = vpop.f32.mrb[0].mxu0
        %v598 = vadd.f32 %v470, %v597
        %v599 = vpop.f32.mrb[0].mxu0
        %600 = vmatprep.mubr.f32.mxu0 0.0
        %601 = vmatmul.mubr.f32.gmra.mrb[0].mxu0 %v499
        %v602 = vpop.f32.mrb[0].mxu0
        %v603 = vadd.f32 %v475, %v602
        %v604 = vpop.f32.mrb[0].mxu0
        %605 = vdwg.mxu0
        %v606 = vmul.f32 %v568, %v568
        %v607 = vmul.f32 %v573, %v573
        %v608 = vmul.f32 %v578, %v578
        %v609 = vmul.f32 %v583, %v583
        %v610 = vmul.f32 %v588, %v588
        %v611 = vmul.f32 %v593, %v593
        %v612 = vmul.f32 %v598, %v598
        %v613 = vmul.f32 %v603, %v603
        %v614 = vadd.f32 %v606, %v607
        %v615 = vadd.f32 %v614, %v608
        %v616 = vadd.f32 %v615, %v609
        %v617 = vadd.f32 %v616, %v610
        %v618 = vadd.f32 %v617, %v611
        %v619 = vadd.f32 %v618, %v612
        %v620 = vadd.f32 %v619, %v613
        %v621 = vrot.slane %v620, 4
        %v622 = vadd.f32 %v620, %v621
        %v623 = vrot.slane %v622, 2
        %v624 = vadd.f32 %v622, %v623
        %v625 = vrot.slane %v624, 1
        %v626 = vadd.f32 %v624, %v625
        %v627 = vmax.f32 %v626, 1e-24
        %v628 = vrsqrt.pop %v627
        %v629 = vmul.f32 %v568, %v628
        %v630 = vmul.f32 %v573, %v628
        %v631 = vmul.f32 %v578, %v628
        %v632 = vmul.f32 %v583, %v628
        %v633 = vmul.f32 %v588, %v628
        %v634 = vmul.f32 %v593, %v628
        %v635 = vmul.f32 %v598, %v628
        %v636 = vmul.f32 %v603, %v628
        %637 = vst [vmem:[%s286] sm:$0xff] %v629
        %638 = vst [vmem:[%s286 + $0x8] sm:$0xff] %v630
        %639 = vst [vmem:[%s286 + $0x10] sm:$0xff] %v631
        %640 = vst [vmem:[%s286 + $0x18] sm:$0xff] %v632
        %641 = vst [vmem:[%s286 + $0x20] sm:$0xff] %v633
        %642 = vst [vmem:[%s286 + $0x28] sm:$0xff] %v634
        %643 = vst [vmem:[%s286 + $0x30] sm:$0xff] %v635
        %644 = vst [vmem:[%s286 + $0x38] sm:$0xff] %v636
        %s645 = sand.u32 %s153, 1
        %s646 = scalar_lea.sflag [#allocation4], %s645
        %s647 = sand.u32 %s153, 1
        %s648 = smul.addr %s647, 64
        %s649 = scalar_lea.vmem [#allocation3], %s648
        // Predicated region
        $region79: #{tpu_custom_call.1} parent=73 // pred_check
          %p650 = pneg %p163
        $region80: #{tpu_custom_call.1} parent=73 // pred_check_branch
          %652 = sbr.rel (%p650) target = $region82
        $region81: #{tpu_custom_call.1} parent=73 // pred_region
          %s654 = ssub.s32 1024, 1024
          %655 = vsyncadd %s646, %s654
          %s656 = smul.addr %s23, 16
          %s657 = sadd.s32 %s24, %s656
          %s658 = smul.addr %s657, 128
          %s659 = scalar_lea.hbm %s5, %s658
          %s660 = sshll.u32 %s649, 4
          %s661 = int_to_ptr.vmem [resolvable:$true] %s660
          %666 = dma.vmem_to_hbm [thread:$0]  %s661, 1024, %s659, %s646, 128, 256, 8
        $region82: #{tpu_custom_call.1} parent=73 // pred_fallthru
          _
      $region74: #{tpu_custom_call.1} parent=5 // pred_fallthru
        _
      %p667 = scmp.le.s32.totalorder 2, %s14
      // Predicated region
      $region83: #{tpu_custom_call.1} parent=5 // pred_check
        %p668 = pneg %p667
      $region84: #{tpu_custom_call.1} parent=5 // pred_check_branch
        %670 = sbr.rel (%p668) target = $region86
      $region85: #{tpu_custom_call.1} parent=5 // pred_region
        %s671 = ssub.s32 %s14, 2
        // Predicated region
        $region87: #{tpu_custom_call.1} parent=85 // pred_check
          %p672 = pneg %p169
        $region88: #{tpu_custom_call.1} parent=85 // pred_check_branch
          %674 = sbr.rel (%p672) target = $region90
        $region89: #{tpu_custom_call.1} parent=85 // pred_region
          %s675 = sand.u32 %s154, 1
          %s676 = scalar_lea.sflag [#allocation4], %s675
          %s677 = sand.u32 %s154, 1
          %s678 = smul.addr %s677, 64
          %s679 = scalar_lea.vmem [#allocation3], %s678
          %680 = dma.done %s676, 1024
        $region90: #{tpu_custom_call.1} parent=85 // pred_fallthru
          _
      $region86: #{tpu_custom_call.1} parent=5 // pred_fallthru
        _
    $region6: #{tpu_custom_call.1} parent=1 // loop_footer
      %s18 = sadd.s32 1, %s14
    $region7: #{tpu_custom_call.1} parent=1 // loop_footer_branch
      %13 = sbr.rel target = $region3
    $region8: #{tpu_custom_call.1} parent=1 // loop_exit
      _
    %681 = vsyncpa [#allocation4], 1
    %s682 = scalar_lea.sflag [#allocation4], 1
    %683 = vsyncpa %s682, 1

</llo_original>
